<compile_context>
chip_gen: v7x
topology: tpu7x:2x2x1
jax: 0.10.0
libtpu: 0.0.40
codegen_flags: <defaults>
</compile_context>

<pallas_src>
import jax
import jax.numpy as jnp
from jax.experimental import pallas as pl
from jax.experimental.pallas import tpu as pltpu

MODEL_CONFIG = {
    "input_length": 64,
    "hidden_layers": [64, 32],
    "output_length": 10,
    "input_bitwidth": 2,
    "hidden_bitwidth": 2,
    "output_bitwidth": 2,
    "input_fanin": 6,
    "hidden_fanin": 6,
    "output_fanin": 6,
    "width_n": 2,
    "cuda": False,
}
BN_EPS = 1e-5
RELU_MAX = 1.61           # QuantReLU(max_val=1.61)
PAD = 128                 # lane-dense feature padding for hidden/output dims
MAX_BATCH_TILE = 1024     # rows per grid step (multiple of 8)
MIN_MEGACORE_TILE = 256   # don't split tiles below this just to get 2 steps


def _pick_batch_tile(B):
    """Rows per grid step: multiple of 8 and <= MAX_BATCH_TILE.  For batches
    large enough to matter, force >= 2 grid steps so dimension_semantics
    ("parallel",) actually feeds both v7x TensorCores."""
    if B < 8:
        return B                      # block == full batch dim (legal, tiny)
    tb = min(MAX_BATCH_TILE, (B // 8) * 8)
    if -(-B // tb) < 2 and B // 2 >= MIN_MEGACORE_TILE:
        tb = ((B + 1) // 2 + 7) // 8 * 8
    return tb


# ---------------------------------------------------------------------------
# Fully-fused Pallas kernel: input BN + quant -> (masked linear + folded BN +
# quant) x num_layers.  Weights arrive bf16; epilogue math stays f32 (v5e VPU
# has no bf16).  Quant output scales are folded into the next layer's weights,
# so each quant here is just clamp -> mul -> round producing integer levels.
# ---------------------------------------------------------------------------
def _make_fused_kernel(num_layers, in_bits, hidden_bits, out_bits):
    in_levels = float(2 ** in_bits - 1)
    hid_inv_scale = float(2 ** hidden_bits - 1) / RELU_MAX
    out_levels = float(2 ** out_bits - 1)

    def kernel(x_ref, in_sc_ref, in_sh_ref, w0_ref, wrest_ref, b_ref, o_ref):
        # input BatchNorm1d (eval mode) + QuantHardTanh(0,1) -> integer levels
        # (its 1/3 output scale is folded into w0 at prepare time)
        x = x_ref[...] * in_sc_ref[...] + in_sh_ref[...]
        r = jnp.round(jnp.clip(x, 0.0, 1.0) * in_levels)

        for li in range(num_layers):
            w = w0_ref[...] if li == 0 else wrest_ref[li - 1]
            # masked "sparse" linear; output BN and the previous quantizer's
            # output scale are folded into w/b.  r holds exact small integers,
            # so the bf16 cast into the MXU is lossless.
            y = jnp.dot(r.astype(w.dtype), w,
                        preferred_element_type=jnp.float32) + b_ref[li]
            if li == num_layers - 1:
                # output QuantHardTanh(0,1): keep integer levels (bf16-exact);
                # the 1/3 output scale is applied on (B,10) in the wrapper.
                r = jnp.round(jnp.clip(y, 0.0, 1.0) * out_levels)
            else:
                # QuantReLU(max_val=1.61)
                r = jnp.round(jnp.clip(y, 0.0, RELU_MAX) * hid_inv_scale)

        o_ref[...] = r.astype(o_ref.dtype)

    return kernel


def mnist_neq_forward_pallas(x, fused, cfg):
    B, in_f = x.shape
    pad = fused["b_all"].shape[-1]
    num_layers = fused["b_all"].shape[0]

    tb = _pick_batch_tile(B)
    grid = (pl.cdiv(B, tb),)

    kernel = _make_fused_kernel(num_layers, cfg["input_bitwidth"],
                                cfg["hidden_bitwidth"], cfg["output_bitwidth"])

    consts = [fused["in_sc"], fused["in_sh"], fused["w0"],
              fused["wrest"], fused["b_all"]]

    def const_spec(a):
        # constant block index across the grid -> DMA'd once per invocation
        return pl.BlockSpec(a.shape, lambda i, nd=a.ndim: (0,) * nd)

    in_specs = [pl.BlockSpec((tb, in_f), lambda i: (i, 0))]
    in_specs += [const_spec(a) for a in consts]

    out = pl.pallas_call(
        kernel,
        grid=grid,
        in_specs=in_specs,
        out_specs=pl.BlockSpec((tb, pad), lambda i: (i, 0)),
        # lane-dense bf16 integer quant levels; OOB rows of the last (partial)
        # tile are never written back (Pallas clips the writeback DMA) and the
        # useful (B, 10) slice is extracted below.
        out_shape=jax.ShapeDtypeStruct((B, pad), jnp.bfloat16),
        compiler_params=pltpu.CompilerParams(
            dimension_semantics=("parallel",)),
    )(x, *consts)

    out_scale = 1.0 / float(2 ** cfg["output_bitwidth"] - 1)
    return out[:, :cfg["output_length"]].astype(jnp.float32) * out_scale


# ---------------------------------------------------------------------------
# Deterministic parameter initialization (mirrors __init__ shapes)
# ---------------------------------------------------------------------------
def init_model_params(key, cfg):
    num_neurons = [cfg["input_length"]] + cfg["hidden_layers"] + [cfg["output_length"]]
    layers = []
    for i in range(1, len(num_neurons)):
        in_f, out_f = num_neurons[i - 1], num_neurons[i]
        if i == 1:
            fan_in = cfg["input_fanin"]
        elif i == len(num_neurons) - 1:
            fan_in = cfg["output_fanin"]
        else:
            fan_in = cfg["hidden_fanin"]
        key, kw, kb, km, kg, kbeta, kin = jax.random.split(key, 7)

        w = jax.random.normal(kw, (out_f, in_f), jnp.float32) / jnp.sqrt(float(in_f))
        b = 0.1 * jax.random.normal(kb, (out_f,), jnp.float32)

        # FeatureMask: fan_in randomly-selected inputs per output neuron
        rnd = jax.random.uniform(km, (out_f, in_f))
        sel = jnp.argsort(rnd, axis=1)[:, :fan_in]
        mask = jnp.zeros((out_f, in_f), jnp.float32).at[
            jnp.arange(out_f)[:, None], sel
        ].set(1.0)
        wT_masked = (w * mask).T  # (in_f, out_f)

        # output BatchNorm1d(out_f), eval mode with running_mean=0, running_var=1
        gamma = 1.0 + 0.05 * jax.random.normal(kg, (out_f,), jnp.float32)
        beta = 0.05 * jax.random.normal(kbeta, (out_f,), jnp.float32)
        bn_scale = gamma / jnp.sqrt(1.0 + BN_EPS)
        bn_shift = beta  # running_mean = 0

        layer = {
            "wT": wT_masked,
            "b": b.reshape(1, out_f),
            "bn_scale": bn_scale.reshape(1, out_f),
            "bn_shift": bn_shift.reshape(1, out_f),
        }
        if i == 1:
            # input BatchNorm1d(in_f), eval mode
            gin = 1.0 + 0.05 * jax.random.normal(kin, (in_f,), jnp.float32)
            layer["in_bn_scale"] = (gin / jnp.sqrt(1.0 + BN_EPS)).reshape(1, in_f)
            layer["in_bn_shift"] = jnp.zeros((1, in_f), jnp.float32)
        layers.append(layer)
    return layers


def prepare_fused_params(layers, cfg, pad=PAD):
    """Fold output BN and the preceding quantizer's output scale into each
    layer's weights/bias, pad output features to lane-dense 128, cast weights
    to bf16, and stack small constants.  Layer 0's input stays at the real 64
    features so the kernel consumes x directly (no wrapper-side feature pad)."""
    in_bits = cfg["input_bitwidth"]
    hid_bits = cfg["hidden_bitwidth"]
    s_in = 1.0 / float(2 ** in_bits - 1)          # input-quant output scale (1/3)
    s_hid = RELU_MAX / float(2 ** hid_bits - 1)   # hidden-quant output scale

    l0 = layers[0]
    in_sc = l0["in_bn_scale"]          # (1, 64) f32
    in_sh = l0["in_bn_shift"]          # (1, 64) f32

    ws, bs = [], []
    for li, lp in enumerate(layers):
        in_f, out_f = lp["wT"].shape
        act_scale = s_in if li == 0 else s_hid
        w_fold = lp["wT"] * lp["bn_scale"] * act_scale      # (in_f, out_f)
        b_fold = lp["b"] * lp["bn_scale"] + lp["bn_shift"]  # (1, out_f)
        in_pad = in_f if li == 0 else pad
        wp = jnp.zeros((in_pad, pad), jnp.float32).at[:in_f, :out_f].set(w_fold)
        bp = jnp.zeros((1, pad), jnp.float32).at[:, :out_f].set(b_fold)
        ws.append(wp.astype(jnp.bfloat16))   # bf16 into the MXU
        bs.append(bp)                        # bias / epilogue stays f32

    return {
        "in_sc": in_sc,
        "in_sh": in_sh,
        "w0": ws[0],                          # (64, 128) bf16
        "wrest": jnp.stack(ws[1:], axis=0),   # (num_layers-1, 128, 128) bf16
        "b_all": jnp.stack(bs, axis=0),       # (num_layers, 1, 128) f32
    }


# ---------------------------------------------------------------------------
# Pure-JAX reference of the same math (same folded/padded bf16 params)
# ---------------------------------------------------------------------------
def mnist_neq_forward_ref(x, fused, cfg):
    in_levels = float(2 ** cfg["input_bitwidth"] - 1)
    hid_inv = float(2 ** cfg["hidden_bitwidth"] - 1) / RELU_MAX
    out_levels = float(2 ** cfg["output_bitwidth"] - 1)

    h = x * fused["in_sc"] + fused["in_sh"]
    r = jnp.round(jnp.clip(h, 0.0, 1.0) * in_levels)
    ws = [fused["w0"]] + [fused["wrest"][i] for i in range(fused["wrest"].shape[0])]
    n = len(ws)
    for li, w in enumerate(ws):
        y = jnp.dot(r.astype(w.dtype), w,
                    preferred_element_type=jnp.float32) + fused["b_all"][li]
        if li == n - 1:
            r = jnp.round(jnp.clip(y, 0.0, 1.0) * out_levels)
        else:
            r = jnp.round(jnp.clip(y, 0.0, RELU_MAX) * hid_inv)
    return r[:, :cfg["output_length"]] * (1.0 / out_levels)


# ---------------------------------------------------------------------------
if __name__ == "__main__":
    key = jax.random.PRNGKey(0)
    key_params, key_x = jax.random.split(key)

    layers = init_model_params(key_params, MODEL_CONFIG)
    fused = prepare_fused_params(layers, MODEL_CONFIG)
    x = jax.random.normal(key_x, (2, MODEL_CONFIG["input_length"]), jnp.float32)

    out = mnist_neq_forward_pallas(x, fused, MODEL_CONFIG)
    out = jax.block_until_ready(out)

    ref = mnist_neq_forward_ref(x, fused, MODEL_CONFIG)
    assert out.shape == (2, MODEL_CONFIG["output_length"])
    assert jnp.allclose(out, ref, atol=1e-5, rtol=1e-5), "Pallas kernel mismatch vs JAX reference"

    print("KERNEL_OK")
</pallas_src>

<mosaic_0001>
module attributes {stable_mosaic.version = 11 : i64} {
  func.func @kernel(%arg0: i32, %arg1: memref<2x64xf32, #tpu.memory_space<vmem>>, %arg2: memref<1x64xf32, #tpu.memory_space<vmem>>, %arg3: memref<1x64xf32, #tpu.memory_space<vmem>>, %arg4: memref<64x128xbf16, #tpu.memory_space<vmem>>, %arg5: memref<2x128x128xbf16, #tpu.memory_space<vmem>>, %arg6: memref<3x1x128xf32, #tpu.memory_space<vmem>>, %arg7: memref<2x128xbf16, #tpu.memory_space<vmem>>) attributes {dimension_semantics = [#tpu.dimension_semantics<parallel>], iteration_bounds = array<i64: 1>, scalar_prefetch = 0 : i64, scratch_operands = 0 : i64, tpu.core_type = #tpu.core_type<tc>, window_params = [{transform_indices = @transform_0, window_bounds = array<i64: 2, 64>}, {pipeline_mode = #tpu.pipeline_mode<synchronous>, transform_indices = @transform_1, window_bounds = array<i64: 1, 64>}, {pipeline_mode = #tpu.pipeline_mode<synchronous>, transform_indices = @transform_2, window_bounds = array<i64: 1, 64>}, {pipeline_mode = #tpu.pipeline_mode<synchronous>, transform_indices = @transform_3, window_bounds = array<i64: 64, 128>}, {pipeline_mode = #tpu.pipeline_mode<synchronous>, transform_indices = @transform_4, window_bounds = array<i64: 2, 128, 128>}, {pipeline_mode = #tpu.pipeline_mode<synchronous>, transform_indices = @transform_5, window_bounds = array<i64: 3, 1, 128>}, {transform_indices = @transform_6, window_bounds = array<i64: 2, 128>}]} {
    %c0 = arith.constant 0 : index
    %c0_0 = arith.constant 0 : index
    %0 = vector.load %arg1[%c0, %c0_0] : memref<2x64xf32, #tpu.memory_space<vmem>>, vector<2x64xf32>
    %c0_1 = arith.constant 0 : index
    %c0_2 = arith.constant 0 : index
    %1 = vector.load %arg2[%c0_1, %c0_2] : memref<1x64xf32, #tpu.memory_space<vmem>>, vector<1x64xf32>
    %2 = vector.broadcast %1 : vector<1x64xf32> to vector<2x64xf32>
    %3 = arith.mulf %0, %2 : vector<2x64xf32>
    %c0_3 = arith.constant 0 : index
    %c0_4 = arith.constant 0 : index
    %4 = vector.load %arg3[%c0_3, %c0_4] : memref<1x64xf32, #tpu.memory_space<vmem>>, vector<1x64xf32>
    %5 = vector.broadcast %4 : vector<1x64xf32> to vector<2x64xf32>
    %6 = arith.addf %3, %5 : vector<2x64xf32>
    %cst = arith.constant 0.000000e+00 : f32
    %cst_5 = arith.constant 1.000000e+00 : f32
    %7 = vector.broadcast %cst : f32 to vector<2x64xf32>
    %8 = arith.maximumf %7, %6 : vector<2x64xf32>
    %9 = vector.broadcast %cst_5 : f32 to vector<2x64xf32>
    %10 = arith.minimumf %9, %8 : vector<2x64xf32>
    %cst_6 = arith.constant 3.000000e+00 : f32
    %11 = vector.broadcast %cst_6 : f32 to vector<2x64xf32>
    %12 = arith.mulf %10, %11 : vector<2x64xf32>
    %13 = math.roundeven %12 : vector<2x64xf32>
    %c0_7 = arith.constant 0 : index
    %c0_8 = arith.constant 0 : index
    %14 = vector.load %arg4[%c0_7, %c0_8] : memref<64x128xbf16, #tpu.memory_space<vmem>>, vector<64x128xbf16>
    %15 = arith.truncf %13 : vector<2x64xf32> to vector<2x64xbf16>
    %cst_9 = arith.constant dense<0.000000e+00> : vector<2x128xf32>
    %16 = tpu.matmul %15, %14, %cst_9 {dimension_numbers = #tpu.dot_dimension_numbers<[1], [0], [0], [1], [0, 0, 1, 1], [], []>} : vector<2x64xbf16>, vector<64x128xbf16>, vector<2x128xf32> -> vector<2x128xf32>
    %c0_10 = arith.constant 0 : index
    %c0_11 = arith.constant 0 : index
    %c0_12 = arith.constant 0 : index
    %17 = vector.load %arg6[%c0_10, %c0_11, %c0_12] : memref<3x1x128xf32, #tpu.memory_space<vmem>>, vector<1x1x128xf32>
    %18 = vector.shape_cast %17 : vector<1x1x128xf32> to vector<1x128xf32>
    %19 = vector.broadcast %18 : vector<1x128xf32> to vector<2x128xf32>
    %20 = arith.addf %16, %19 : vector<2x128xf32>
    %cst_13 = arith.constant 0.000000e+00 : f32
    %cst_14 = arith.constant 1.610000e+00 : f32
    %21 = vector.broadcast %cst_13 : f32 to vector<2x128xf32>
    %22 = arith.maximumf %21, %20 : vector<2x128xf32>
    %23 = vector.broadcast %cst_14 : f32 to vector<2x128xf32>
    %24 = arith.minimumf %23, %22 : vector<2x128xf32>
    %cst_15 = arith.constant 1.86335409 : f32
    %25 = vector.broadcast %cst_15 : f32 to vector<2x128xf32>
    %26 = arith.mulf %24, %25 : vector<2x128xf32>
    %27 = math.roundeven %26 : vector<2x128xf32>
    %c0_16 = arith.constant 0 : index
    %c0_17 = arith.constant 0 : index
    %c0_18 = arith.constant 0 : index
    %28 = vector.load %arg5[%c0_16, %c0_17, %c0_18] : memref<2x128x128xbf16, #tpu.memory_space<vmem>>, vector<1x128x128xbf16>
    %29 = vector.shape_cast %28 : vector<1x128x128xbf16> to vector<128x128xbf16>
    %30 = arith.truncf %27 : vector<2x128xf32> to vector<2x128xbf16>
    %cst_19 = arith.constant dense<0.000000e+00> : vector<2x128xf32>
    %31 = tpu.matmul %30, %29, %cst_19 {dimension_numbers = #tpu.dot_dimension_numbers<[1], [0], [0], [1], [0, 0, 1, 1], [], []>} : vector<2x128xbf16>, vector<128x128xbf16>, vector<2x128xf32> -> vector<2x128xf32>
    %c1 = arith.constant 1 : index
    %c0_20 = arith.constant 0 : index
    %c0_21 = arith.constant 0 : index
    %32 = vector.load %arg6[%c1, %c0_20, %c0_21] : memref<3x1x128xf32, #tpu.memory_space<vmem>>, vector<1x1x128xf32>
    %33 = vector.shape_cast %32 : vector<1x1x128xf32> to vector<1x128xf32>
    %34 = vector.broadcast %33 : vector<1x128xf32> to vector<2x128xf32>
    %35 = arith.addf %31, %34 : vector<2x128xf32>
    %cst_22 = arith.constant 0.000000e+00 : f32
    %cst_23 = arith.constant 1.610000e+00 : f32
    %36 = vector.broadcast %cst_22 : f32 to vector<2x128xf32>
    %37 = arith.maximumf %36, %35 : vector<2x128xf32>
    %38 = vector.broadcast %cst_23 : f32 to vector<2x128xf32>
    %39 = arith.minimumf %38, %37 : vector<2x128xf32>
    %cst_24 = arith.constant 1.86335409 : f32
    %40 = vector.broadcast %cst_24 : f32 to vector<2x128xf32>
    %41 = arith.mulf %39, %40 : vector<2x128xf32>
    %42 = math.roundeven %41 : vector<2x128xf32>
    %c1_25 = arith.constant 1 : index
    %c0_26 = arith.constant 0 : index
    %c0_27 = arith.constant 0 : index
    %43 = vector.load %arg5[%c1_25, %c0_26, %c0_27] : memref<2x128x128xbf16, #tpu.memory_space<vmem>>, vector<1x128x128xbf16>
    %44 = vector.shape_cast %43 : vector<1x128x128xbf16> to vector<128x128xbf16>
    %45 = arith.truncf %42 : vector<2x128xf32> to vector<2x128xbf16>
    %cst_28 = arith.constant dense<0.000000e+00> : vector<2x128xf32>
    %46 = tpu.matmul %45, %44, %cst_28 {dimension_numbers = #tpu.dot_dimension_numbers<[1], [0], [0], [1], [0, 0, 1, 1], [], []>} : vector<2x128xbf16>, vector<128x128xbf16>, vector<2x128xf32> -> vector<2x128xf32>
    %c2 = arith.constant 2 : index
    %c0_29 = arith.constant 0 : index
    %c0_30 = arith.constant 0 : index
    %47 = vector.load %arg6[%c2, %c0_29, %c0_30] : memref<3x1x128xf32, #tpu.memory_space<vmem>>, vector<1x1x128xf32>
    %48 = vector.shape_cast %47 : vector<1x1x128xf32> to vector<1x128xf32>
    %49 = vector.broadcast %48 : vector<1x128xf32> to vector<2x128xf32>
    %50 = arith.addf %46, %49 : vector<2x128xf32>
    %cst_31 = arith.constant 0.000000e+00 : f32
    %cst_32 = arith.constant 1.000000e+00 : f32
    %51 = vector.broadcast %cst_31 : f32 to vector<2x128xf32>
    %52 = arith.maximumf %51, %50 : vector<2x128xf32>
    %53 = vector.broadcast %cst_32 : f32 to vector<2x128xf32>
    %54 = arith.minimumf %53, %52 : vector<2x128xf32>
    %cst_33 = arith.constant 3.000000e+00 : f32
    %55 = vector.broadcast %cst_33 : f32 to vector<2x128xf32>
    %56 = arith.mulf %54, %55 : vector<2x128xf32>
    %57 = math.roundeven %56 : vector<2x128xf32>
    %58 = arith.truncf %57 : vector<2x128xf32> to vector<2x128xbf16>
    %c0_34 = arith.constant 0 : index
    %c0_35 = arith.constant 0 : index
    %59 = vector.load %arg7[%c0_34, %c0_35] : memref<2x128xbf16, #tpu.memory_space<vmem>>, vector<2x128xbf16>
    tpu.vector_store %arg7[%c0_34, %c0_35], %58 {strides = array<i32>} : memref<2x128xbf16, #tpu.memory_space<vmem>>, vector<2x128xbf16>,
    return
  }
  func.func @transform_0(%arg0: i32) -> (i32, i32) {
    %c0_i32 = arith.constant 0 : i32
    %c0_i32_0 = arith.constant 0 : i32
    return %arg0, %c0_i32 : i32, i32
  }
  func.func @transform_1(%arg0: i32) -> (i32, i32) {
    %c0_i32 = arith.constant 0 : i32
    %c0_i32_0 = arith.constant 0 : i32
    %c0_i32_1 = arith.constant 0 : i32
    return %c0_i32, %c0_i32_0 : i32, i32
  }
  func.func @transform_2(%arg0: i32) -> (i32, i32) {
    %c0_i32 = arith.constant 0 : i32
    %c0_i32_0 = arith.constant 0 : i32
    %c0_i32_1 = arith.constant 0 : i32
    return %c0_i32, %c0_i32_0 : i32, i32
  }
  func.func @transform_3(%arg0: i32) -> (i32, i32) {
    %c0_i32 = arith.constant 0 : i32
    %c0_i32_0 = arith.constant 0 : i32
    %c0_i32_1 = arith.constant 0 : i32
    return %c0_i32, %c0_i32_0 : i32, i32
  }
  func.func @transform_4(%arg0: i32) -> (i32, i32, i32) {
    %c0_i32 = arith.constant 0 : i32
    %c0_i32_0 = arith.constant 0 : i32
    %c0_i32_1 = arith.constant 0 : i32
    %c0_i32_2 = arith.constant 0 : i32
    return %c0_i32, %c0_i32_0, %c0_i32_1 : i32, i32, i32
  }
  func.func @transform_5(%arg0: i32) -> (i32, i32, i32) {
    %c0_i32 = arith.constant 0 : i32
    %c0_i32_0 = arith.constant 0 : i32
    %c0_i32_1 = arith.constant 0 : i32
    %c0_i32_2 = arith.constant 0 : i32
    return %c0_i32, %c0_i32_0, %c0_i32_1 : i32, i32, i32
  }
  func.func @transform_6(%arg0: i32) -> (i32, i32) {
    %c0_i32 = arith.constant 0 : i32
    %c0_i32_0 = arith.constant 0 : i32
    return %arg0, %c0_i32 : i32, i32
  }
}

</mosaic_0001>

<llo_original>
// kernel: tpu_custom_call.1
$region0: #{tpu_custom_call.1}
  #allocation0 [shape = 'u32[]', space=smem, size = 0x4, offset = 0x4, fixed_abs, tag = 'smem constant byte address 0x4 - core index']
  #allocation1 [shape = 'u32[144,128]{1,0:T(1,128)}', space=vmem, size = 0x12000, scoped, tag = 'internal scratch']
  %s0 = inlined_call_operand.hbm [shape: f32[2,64], index: 0, kind: input, shape index: {}]
  %s1 = inlined_call_operand.vmem [shape: f32[1,64], index: 1, kind: input, shape index: {}]
  %s2 = inlined_call_operand.vmem [shape: f32[1,64], index: 2, kind: input, shape index: {}]
  %s3 = inlined_call_operand.hbm [shape: bf16[64,128], index: 3, kind: input, shape index: {}]
  %s4 = inlined_call_operand.hbm [shape: bf16[2,128,128], index: 4, kind: input, shape index: {}]
  %s5 = inlined_call_operand.vmem [shape: f32[3,1,128], index: 5, kind: input, shape index: {}]
  %s6 = inlined_call_operand.hbm [shape: bf16[2,128], index: 6, kind: output, shape index: {}]
  %s7 = sld [smem:[#allocation0]]
  $region46: #{tpu_custom_call.1} parent=0
    _
  %s9 = ssub.s32 1, %s7
  %s10 = scalar_select 0, %s9, %s7
  $region1: #{tpu_custom_call.1} parent=0
    #allocation2 [shape = 'u8[1024]{0}', space=vmem, size = 0x400, scoped, tag = 'input window, operand 0, single buffered']
    #allocation3 [shape = 's32[1]{0}', space=sflag, size = 0x4, scoped, tag = 'scoped memory for tpu_custom_call.1']
    #allocation4 [shape = 's32[1]{0}', space=sflag, size = 0x4, scoped, tag = 'scoped memory for tpu_custom_call.1']
    #allocation5 [shape = 'u8[16384]{0}', space=vmem, size = 0x4000, scoped, tag = 'input window, operand 3, single buffered']
    #allocation6 [shape = 's32[1]{0}', space=sflag, size = 0x4, scoped, tag = 'scoped memory for tpu_custom_call.1']
    #allocation7 [shape = 'u8[65536]{0}', space=vmem, size = 0x10000, scoped, tag = 'input window, operand 4, single buffered']
    #allocation8 [shape = 'u8[512]{0}', space=vmem, size = 0x400, scoped, tag = 'output window, operand 0, single buffered']
    %11 = vsyncpa [#allocation3], 0
    %12 = vsyncpa [#allocation6], 0
    %13 = vsyncpa [#allocation4], 0
    // Predicated region
    $region2: #{tpu_custom_call.1} parent=1 // pred_check
      _
    $region3: #{tpu_custom_call.1} parent=1 // pred_check_branch
      %15 = sbr.rel (0) target = $region5
    $region4: #{tpu_custom_call.1} parent=1 // pred_region
      %s17 = ssub.s32 32, 32
      %18 = vsyncadd [#allocation3], %s17
      %s20 = sshll.u32 [#allocation2], 4
      %s21 = int_to_ptr.vmem [resolvable:$true] %s20
      %23 = dma.hbm_to_vmem [thread:$0]  %s0, 32, %s21, [#allocation3]
    $region5: #{tpu_custom_call.1} parent=1 // pred_fallthru
      _
    // Predicated region
    $region6: #{tpu_custom_call.1} parent=1 // pred_check
      _
    $region7: #{tpu_custom_call.1} parent=1 // pred_check_branch
      %25 = sbr.rel (0) target = $region9
    $region8: #{tpu_custom_call.1} parent=1 // pred_region
      _
    $region9: #{tpu_custom_call.1} parent=1 // pred_fallthru
      _
    // Predicated region
    $region10: #{tpu_custom_call.1} parent=1 // pred_check
      _
    $region11: #{tpu_custom_call.1} parent=1 // pred_check_branch
      %27 = sbr.rel (0) target = $region13
    $region12: #{tpu_custom_call.1} parent=1 // pred_region
      _
    $region13: #{tpu_custom_call.1} parent=1 // pred_fallthru
      _
    // Predicated region
    $region14: #{tpu_custom_call.1} parent=1 // pred_check
      _
    $region15: #{tpu_custom_call.1} parent=1 // pred_check_branch
      %29 = sbr.rel (0) target = $region17
    $region16: #{tpu_custom_call.1} parent=1 // pred_region
      %s31 = ssub.s32 512, 512
      %32 = vsyncadd [#allocation6], %s31
      %s33 = sshll.u32 [#allocation5], 4
      %s34 = int_to_ptr.vmem [resolvable:$true] %s33
      %39 = dma.hbm_to_vmem [thread:$0]  %s3, 512, %s34, [#allocation6], 64, 64, 4
    $region17: #{tpu_custom_call.1} parent=1 // pred_fallthru
      _
    // Predicated region
    $region18: #{tpu_custom_call.1} parent=1 // pred_check
      _
    $region19: #{tpu_custom_call.1} parent=1 // pred_check_branch
      %41 = sbr.rel (0) target = $region21
    $region20: #{tpu_custom_call.1} parent=1 // pred_region
      %s43 = ssub.s32 2048, 2048
      %44 = vsyncadd [#allocation6], %s43
      %s45 = sshll.u32 [#allocation7], 4
      %s46 = int_to_ptr.vmem [resolvable:$true] %s45
      %51 = dma.hbm_to_vmem [thread:$0]  %s4, 2048, %s46, [#allocation6], 64, 64, 4
    $region21: #{tpu_custom_call.1} parent=1 // pred_fallthru
      _
    // Predicated region
    $region22: #{tpu_custom_call.1} parent=1 // pred_check
      _
    $region23: #{tpu_custom_call.1} parent=1 // pred_check_branch
      %53 = sbr.rel (0) target = $region25
    $region24: #{tpu_custom_call.1} parent=1 // pred_region
      _
    $region25: #{tpu_custom_call.1} parent=1 // pred_fallthru
      _
    // Predicated region
    $region26: #{tpu_custom_call.1} parent=1 // pred_check
      _
    $region27: #{tpu_custom_call.1} parent=1 // pred_check_branch
      %55 = sbr.rel (0) target = $region29
    $region28: #{tpu_custom_call.1} parent=1 // pred_region
      %56 = dma.done [#allocation3], 32
    $region29: #{tpu_custom_call.1} parent=1 // pred_fallthru
      _
    // Predicated region
    $region30: #{tpu_custom_call.1} parent=1 // pred_check
      _
    $region31: #{tpu_custom_call.1} parent=1 // pred_check_branch
      %58 = sbr.rel (0) target = $region33
    $region32: #{tpu_custom_call.1} parent=1 // pred_region
      %59 = dma.done [#allocation6], 512
    $region33: #{tpu_custom_call.1} parent=1 // pred_fallthru
      _
    // Predicated region
    $region34: #{tpu_custom_call.1} parent=1 // pred_check
      _
    $region35: #{tpu_custom_call.1} parent=1 // pred_check_branch
      %61 = sbr.rel (0) target = $region37
    $region36: #{tpu_custom_call.1} parent=1 // pred_region
      %62 = dma.done [#allocation6], 2048
    $region37: #{tpu_custom_call.1} parent=1 // pred_fallthru
      _
    %v64 = vld [vmem:[#allocation2] sm:$0x3]
    %v65 = vld [vmem:[%s1] sm:$0x1]
    %v67 = vlaneseq
    %v68 = vshrl.u32 %v67, 7
    %v69 = vsub.s32 0, %v68
    %v70 = vrot.slane %v65, %v69
    %v72 = vmul.f32 %v64, %v70
    %v73 = vld [vmem:[%s2] sm:$0x1]
    %v75 = vlaneseq
    %v76 = vshrl.u32 %v75, 7
    %v77 = vsub.s32 0, %v76
    %v78 = vrot.slane %v73, %v77
    %v80 = vadd.f32 %v72, %v78
    %v81 = vmax.f32 %v80, 0.0
    %v82 = vmin.f32 %v81, 1.0
    %v83 = vmul.f32 %v82, 3.0
    %v84 = vround.ne.pseudo %v83
    %v85 = vld [vmem:[#allocation5] sm:$0xf]
    %v86 = vld [vmem:[#allocation5 + $0x4] sm:$0xf]
    %v87 = vld [vmem:[#allocation5 + $0x8] sm:$0xf]
    %v88 = vld [vmem:[#allocation5 + $0xc] sm:$0xf]
    %v89 = vld [vmem:[#allocation5 + $0x10] sm:$0xf]
    %v90 = vld [vmem:[#allocation5 + $0x14] sm:$0xf]
    %v91 = vld [vmem:[#allocation5 + $0x18] sm:$0xf]
    %v92 = vld [vmem:[#allocation5 + $0x1c] sm:$0xf]
    %v93 = vpack.c.bf16 %v84, %v84
    %v94 = vld [vmem:[%s5] sm:$0x1]
    %v96 = vlaneseq
    %v97 = vshrl.u32 %v96, 7
    %v98 = vsub.s32 0, %v97
    %v99 = vrot.slane %v94, %v98
    %v109 = vunpack.c.l.b16 %v85
    %v110 = vunpack.c.l.b16 %v86
    %v111 = vunpack.c.l.b16 %v87
    %v112 = vunpack.c.l.b16 %v88
    %v113 = vunpack.c.l.b16 %v89
    %v114 = vunpack.c.l.b16 %v90
    %v115 = vunpack.c.l.b16 %v91
    %v116 = vunpack.c.l.b16 %v92
    %v117 = vpack.c.b16 %v110, %v109
    %v118 = vpack.c.b16 %v112, %v111
    %v119 = vpack.c.b16 %v114, %v113
    %v120 = vpack.c.b16 %v116, %v115
    %vm125 = vcmask 523264
    %v127 = vsel %vm125, %v93, 0
    %129 = vmatprep.subr.bf16.mxu0 0
    %130 = vmatpush1.bf16.msra.mxu0 %v117
    %131 = vmatprep.subr.bf16.mxu0 0
    %132 = vmatpush1.bf16.msra.mxu0 %v118
    %133 = vmatprep.subr.bf16.mxu0 0
    %134 = vmatpush1.bf16.msra.mxu0 %v119
    %135 = vmatprep.subr.bf16.mxu0 0
    %136 = vmatpush1.bf16.msra.mxu0 %v120
    %137 = vmatprep.subr.bf16.mxu0 0
    %138 = vmatpush1.bf16.msra.mxu0 0
    %139 = vmatprep.subr.bf16.mxu0 0
    %140 = vmatpush1.bf16.msra.mxu0 0
    %141 = vmatprep.subr.bf16.mxu0 0
    %142 = vmatpush1.bf16.msra.mxu0 0
    %143 = vmatprep.subr.bf16.mxu0 0
    %144 = vmatpush1.bf16.msra.mxu0 0
    %145 = vmatprep.subr.bf16.mxu0 0
    %146 = vmatpush1.bf16.msra.mxu0 0
    %147 = vmatprep.subr.bf16.mxu0 0
    %148 = vmatpush1.bf16.msra.mxu0 0
    %149 = vmatprep.subr.bf16.mxu0 0
    %150 = vmatpush1.bf16.msra.mxu0 0
    %151 = vmatprep.subr.bf16.mxu0 0
    %152 = vmatpush1.bf16.msra.mxu0 0
    %153 = vmatprep.subr.bf16.mxu0 0
    %154 = vmatpush1.bf16.msra.mxu0 0
    %155 = vmatprep.subr.bf16.mxu0 0
    %156 = vmatpush1.bf16.msra.mxu0 0
    %157 = vmatprep.subr.bf16.mxu0 0
    %158 = vmatpush1.bf16.msra.mxu0 0
    %159 = vmatprep.subr.bf16.mxu0 0
    %160 = vmatpush1.bf16.msra.mxu0 0
    %161 = vmatprep.mubr.bf16.mxu0 0
    %162 = vmatmul.mubr.bf16.gmra.mrb[0].mxu0 %v127
    %v163 = vpop.f32.mrb[0].mxu0
    %v164 = vadd.f32 %v99, %v163
    %v165 = vpop.f32.mrb[0].mxu0
    %v166 = vpop.f32.mrb[0].mxu0
    %v167 = vpop.f32.mrb[0].mxu0
    %168 = vdwg.mxu0
    %v169 = vmax.f32 %v164, 0.0
    %v170 = vmin.f32 %v169, 1.61
    %v171 = vmul.f32 %v170, 1.8633541
    %v172 = vround.ne.pseudo %v171
    %v173 = vld [vmem:[#allocation7] sm:$0xf]
    %v174 = vld [vmem:[#allocation7 + $0x4] sm:$0xf]
    %v175 = vld [vmem:[#allocation7 + $0x8] sm:$0xf]
    %v176 = vld [vmem:[#allocation7 + $0xc] sm:$0xf]
    %v177 = vld [vmem:[#allocation7 + $0x10] sm:$0xf]
    %v178 = vld [vmem:[#allocation7 + $0x14] sm:$0xf]
    %v179 = vld [vmem:[#allocation7 + $0x18] sm:$0xf]
    %v180 = vld [vmem:[#allocation7 + $0x1c] sm:$0xf]
    %v181 = vld [vmem:[#allocation7 + $0x20] sm:$0xf]
    %v182 = vld [vmem:[#allocation7 + $0x24] sm:$0xf]
    %v183 = vld [vmem:[#allocation7 + $0x28] sm:$0xf]
    %v184 = vld [vmem:[#allocation7 + $0x2c] sm:$0xf]
    %v185 = vld [vmem:[#allocation7 + $0x30] sm:$0xf]
    %v186 = vld [vmem:[#allocation7 + $0x34] sm:$0xf]
    %v187 = vld [vmem:[#allocation7 + $0x38] sm:$0xf]
    %v188 = vld [vmem:[#allocation7 + $0x3c] sm:$0xf]
    %v189 = vpack.c.bf16 %v172, %v172
    %s190 = scalar_lea.vmem %s5, 1
    %v191 = vld [vmem:[%s190] sm:$0x1]
    %v193 = vlaneseq
    %v194 = vshrl.u32 %v193, 7
    %v195 = vsub.s32 0, %v194
    %v196 = vrot.slane %v191, %v195
    %v214 = vunpack.c.l.b16 %v173
    %v215 = vunpack.c.l.b16 %v174
    %v216 = vunpack.c.l.b16 %v175
    %v217 = vunpack.c.l.b16 %v176
    %v218 = vunpack.c.l.b16 %v177
    %v219 = vunpack.c.l.b16 %v178
    %v220 = vunpack.c.l.b16 %v179
    %v221 = vunpack.c.l.b16 %v180
    %v222 = vunpack.c.l.b16 %v181
    %v223 = vunpack.c.l.b16 %v182
    %v224 = vunpack.c.l.b16 %v183
    %v225 = vunpack.c.l.b16 %v184
    %v226 = vunpack.c.l.b16 %v185
    %v227 = vunpack.c.l.b16 %v186
    %v228 = vunpack.c.l.b16 %v187
    %v229 = vunpack.c.l.b16 %v188
    %v230 = vpack.c.b16 %v215, %v214
    %v231 = vpack.c.b16 %v217, %v216
    %v232 = vpack.c.b16 %v219, %v218
    %v233 = vpack.c.b16 %v221, %v220
    %v234 = vpack.c.b16 %v223, %v222
    %v235 = vpack.c.b16 %v225, %v224
    %v236 = vpack.c.b16 %v227, %v226
    %v237 = vpack.c.b16 %v229, %v228
    %246 = vmatprep.subr.bf16.mxu0 0
    %247 = vmatpush1.bf16.msra.mxu0 %v230
    %248 = vmatprep.subr.bf16.mxu0 0
    %249 = vmatpush1.bf16.msra.mxu0 %v231
    %250 = vmatprep.subr.bf16.mxu0 0
    %251 = vmatpush1.bf16.msra.mxu0 %v232
    %252 = vmatprep.subr.bf16.mxu0 0
    %253 = vmatpush1.bf16.msra.mxu0 %v233
    %254 = vmatprep.subr.bf16.mxu0 0
    %255 = vmatpush1.bf16.msra.mxu0 %v234
    %256 = vmatprep.subr.bf16.mxu0 0
    %257 = vmatpush1.bf16.msra.mxu0 %v235
    %258 = vmatprep.subr.bf16.mxu0 0
    %259 = vmatpush1.bf16.msra.mxu0 %v236
    %260 = vmatprep.subr.bf16.mxu0 0
    %261 = vmatpush1.bf16.msra.mxu0 %v237
    %262 = vmatprep.subr.bf16.mxu0 0
    %263 = vmatpush1.bf16.msra.mxu0 0
    %264 = vmatprep.subr.bf16.mxu0 0
    %265 = vmatpush1.bf16.msra.mxu0 0
    %266 = vmatprep.subr.bf16.mxu0 0
    %267 = vmatpush1.bf16.msra.mxu0 0
    %268 = vmatprep.subr.bf16.mxu0 0
    %269 = vmatpush1.bf16.msra.mxu0 0
    %270 = vmatprep.subr.bf16.mxu0 0
    %271 = vmatpush1.bf16.msra.mxu0 0
    %272 = vmatprep.subr.bf16.mxu0 0
    %273 = vmatpush1.bf16.msra.mxu0 0
    %274 = vmatprep.subr.bf16.mxu0 0
    %275 = vmatpush1.bf16.msra.mxu0 0
    %276 = vmatprep.subr.bf16.mxu0 0
    %277 = vmatpush1.bf16.msra.mxu0 0
    %278 = vmatprep.mubr.bf16.mxu0 0
    %279 = vmatmul.mubr.bf16.gmra.mrb[0].mxu0 %v189
    %v280 = vpop.f32.mrb[0].mxu0
    %v281 = vadd.f32 %v196, %v280
    %v282 = vpop.f32.mrb[0].mxu0
    %v283 = vpop.f32.mrb[0].mxu0
    %v284 = vpop.f32.mrb[0].mxu0
    %285 = vdwg.mxu0
    %v286 = vmax.f32 %v281, 0.0
    %v287 = vmin.f32 %v286, 1.61
    %v288 = vmul.f32 %v287, 1.8633541
    %v289 = vround.ne.pseudo %v288
    %s290 = scalar_lea.vmem [#allocation7], 64
    %v291 = vld [vmem:[%s290] sm:$0xf]
    %v292 = vld [vmem:[%s290 + $0x4] sm:$0xf]
    %v293 = vld [vmem:[%s290 + $0x8] sm:$0xf]
    %v294 = vld [vmem:[%s290 + $0xc] sm:$0xf]
    %v295 = vld [vmem:[%s290 + $0x10] sm:$0xf]
    %v296 = vld [vmem:[%s290 + $0x14] sm:$0xf]
    %v297 = vld [vmem:[%s290 + $0x18] sm:$0xf]
    %v298 = vld [vmem:[%s290 + $0x1c] sm:$0xf]
    %v299 = vld [vmem:[%s290 + $0x20] sm:$0xf]
    %v300 = vld [vmem:[%s290 + $0x24] sm:$0xf]
    %v301 = vld [vmem:[%s290 + $0x28] sm:$0xf]
    %v302 = vld [vmem:[%s290 + $0x2c] sm:$0xf]
    %v303 = vld [vmem:[%s290 + $0x30] sm:$0xf]
    %v304 = vld [vmem:[%s290 + $0x34] sm:$0xf]
    %v305 = vld [vmem:[%s290 + $0x38] sm:$0xf]
    %v306 = vld [vmem:[%s290 + $0x3c] sm:$0xf]
    %v307 = vpack.c.bf16 %v289, %v289
    %s308 = scalar_lea.vmem %s5, 2
    %v309 = vld [vmem:[%s308] sm:$0x1]
    %v311 = vlaneseq
    %v312 = vshrl.u32 %v311, 7
    %v313 = vsub.s32 0, %v312
    %v314 = vrot.slane %v309, %v313
    %v332 = vunpack.c.l.b16 %v291
    %v333 = vunpack.c.l.b16 %v292
    %v334 = vunpack.c.l.b16 %v293
    %v335 = vunpack.c.l.b16 %v294
    %v336 = vunpack.c.l.b16 %v295
    %v337 = vunpack.c.l.b16 %v296
    %v338 = vunpack.c.l.b16 %v297
    %v339 = vunpack.c.l.b16 %v298
    %v340 = vunpack.c.l.b16 %v299
    %v341 = vunpack.c.l.b16 %v300
    %v342 = vunpack.c.l.b16 %v301
    %v343 = vunpack.c.l.b16 %v302
    %v344 = vunpack.c.l.b16 %v303
    %v345 = vunpack.c.l.b16 %v304
    %v346 = vunpack.c.l.b16 %v305
    %v347 = vunpack.c.l.b16 %v306
    %v348 = vpack.c.b16 %v333, %v332
    %v349 = vpack.c.b16 %v335, %v334
    %v350 = vpack.c.b16 %v337, %v336
    %v351 = vpack.c.b16 %v339, %v338
    %v352 = vpack.c.b16 %v341, %v340
    %v353 = vpack.c.b16 %v343, %v342
    %v354 = vpack.c.b16 %v345, %v344
    %v355 = vpack.c.b16 %v347, %v346
    %364 = vmatprep.subr.bf16.mxu0 0
    %365 = vmatpush1.bf16.msra.mxu0 %v348
    %366 = vmatprep.subr.bf16.mxu0 0
    %367 = vmatpush1.bf16.msra.mxu0 %v349
    %368 = vmatprep.subr.bf16.mxu0 0
    %369 = vmatpush1.bf16.msra.mxu0 %v350
    %370 = vmatprep.subr.bf16.mxu0 0
    %371 = vmatpush1.bf16.msra.mxu0 %v351
    %372 = vmatprep.subr.bf16.mxu0 0
    %373 = vmatpush1.bf16.msra.mxu0 %v352
    %374 = vmatprep.subr.bf16.mxu0 0
    %375 = vmatpush1.bf16.msra.mxu0 %v353
    %376 = vmatprep.subr.bf16.mxu0 0
    %377 = vmatpush1.bf16.msra.mxu0 %v354
    %378 = vmatprep.subr.bf16.mxu0 0
    %379 = vmatpush1.bf16.msra.mxu0 %v355
    %380 = vmatprep.subr.bf16.mxu0 0
    %381 = vmatpush1.bf16.msra.mxu0 0
    %382 = vmatprep.subr.bf16.mxu0 0
    %383 = vmatpush1.bf16.msra.mxu0 0
    %384 = vmatprep.subr.bf16.mxu0 0
    %385 = vmatpush1.bf16.msra.mxu0 0
    %386 = vmatprep.subr.bf16.mxu0 0
    %387 = vmatpush1.bf16.msra.mxu0 0
    %388 = vmatprep.subr.bf16.mxu0 0
    %389 = vmatpush1.bf16.msra.mxu0 0
    %390 = vmatprep.subr.bf16.mxu0 0
    %391 = vmatpush1.bf16.msra.mxu0 0
    %392 = vmatprep.subr.bf16.mxu0 0
    %393 = vmatpush1.bf16.msra.mxu0 0
    %394 = vmatprep.subr.bf16.mxu0 0
    %395 = vmatpush1.bf16.msra.mxu0 0
    %396 = vmatprep.mubr.bf16.mxu0 0
    %397 = vmatmul.mubr.bf16.gmra.mrb[0].mxu0 %v307
    %v398 = vpop.f32.mrb[0].mxu0
    %v399 = vadd.f32 %v314, %v398
    %v400 = vpop.f32.mrb[0].mxu0
    %v401 = vpop.f32.mrb[0].mxu0
    %v402 = vpop.f32.mrb[0].mxu0
    %403 = vdwg.mxu0
    %v404 = vmax.f32 %v399, 0.0
    %v405 = vmin.f32 %v404, 1.0
    %v406 = vmul.f32 %v405, 3.0
    %v407 = vround.ne.pseudo %v406
    %v408 = vpack.c.bf16 %v407, %v407
    %409 = vst [vmem:[#allocation8] sm:$0x1] %v408
    // Predicated region
    $region38: #{tpu_custom_call.1} parent=1 // pred_check
      _
    $region39: #{tpu_custom_call.1} parent=1 // pred_check_branch
      %411 = sbr.rel (0) target = $region41
    $region40: #{tpu_custom_call.1} parent=1 // pred_region
      %s413 = ssub.s32 16, 16
      %414 = vsyncadd [#allocation4], %s413
      %s416 = sshll.u32 [#allocation8], 4
      %s417 = int_to_ptr.vmem [resolvable:$true] %s416
      %419 = dma.vmem_to_hbm [thread:$0]  %s417, 16, %s6, [#allocation4]
    $region41: #{tpu_custom_call.1} parent=1 // pred_fallthru
      _
    // Predicated region
    $region42: #{tpu_custom_call.1} parent=1 // pred_check
      _
    $region43: #{tpu_custom_call.1} parent=1 // pred_check_branch
      %421 = sbr.rel (0) target = $region45
    $region44: #{tpu_custom_call.1} parent=1 // pred_region
      %422 = dma.done [#allocation4], 16
    $region45: #{tpu_custom_call.1} parent=1 // pred_fallthru
      _
    %423 = vsyncpa [#allocation3], 1
    %424 = vsyncpa [#allocation6], 1
    %425 = vsyncpa [#allocation4], 1

</llo_original>
